<compile_context>
chip_gen: v7x
topology: tpu7x:2x2x1
jax: 0.10.0
libtpu: 0.0.40
codegen_flags: <defaults>
</compile_context>

<pallas_src>
import functools

import jax
import jax.numpy as jnp
from jax.experimental import pallas as pl
from jax.experimental.pallas import tpu as pltpu

_LANE = 128


def _round_up(n, m):
    return ((n + m - 1) // m) * m


# ----------------------------- kernels -------------------------------------

def _q_kernel(x_ref, w1_ref, b1_ref, wq_ref, bq_ref, out_ref):
    # hidden layer + ReLU  (MXU matmul, VPU max)
    h = jnp.dot(x_ref[...], w1_ref[...], preferred_element_type=jnp.float32)
    h = jnp.maximum(h + b1_ref[...], 0.0)
    # output head (wq/bq zero-padded to lane-dense width; real cols 0..A-1)
    q = jnp.dot(h, wq_ref[...], preferred_element_type=jnp.float32) + bq_ref[...]
    out_ref[...] = q.astype(out_ref.dtype)


def _dueling_kernel(x_ref, w1_ref, b1_ref, wh_ref, bh_ref, out_ref, *, n_output):
    # Fused dueling head.  wh/bh column layout:
    #   cols 0..n_output-1 : advantage weights
    #   col  n_output      : value weights
    #   cols n_output+1..  : exact zeros (lane padding)
    h = jnp.dot(x_ref[...], w1_ref[...], preferred_element_type=jnp.float32)
    h = jnp.maximum(h + b1_ref[...], 0.0)
    head = jnp.dot(h, wh_ref[...], preferred_element_type=jnp.float32) + bh_ref[...]

    value = head[:, n_output:n_output + 1]                    # (B, 1)
    # Padded columns are exactly zero, so sum(head) = sum(adv) + value.
    total = jnp.sum(head, axis=1, keepdims=True)
    adv_mean = (total - value) * jnp.float32(1.0 / n_output)  # compile-time recip
    # Columns 0..n_output-1 carry value + (adv - mean); padded cols are sliced
    # off in the wrapper, so writing them (garbage) keeps the store lane-dense.
    out_ref[...] = (value + (head - adv_mean)).astype(out_ref.dtype)


# ----------------------------- wrappers ------------------------------------

def _vmem_spec():
    # full array resident in VMEM, no tiling (shapes are tiny)
    return pl.BlockSpec(memory_space=pltpu.MemorySpace.VMEM)


def net_forward(x, kparams, dueling=False):
    """Pallas forward pass.  x: (B, n_feature) float32, kparams from
    prepare_kernel_params()."""
    B = x.shape[0]
    n_output = kparams["n_output"]
    if dueling:
        args = (x, kparams["w1"], kparams["b1"], kparams["wh"], kparams["bh"])
        kernel = functools.partial(_dueling_kernel, n_output=n_output)
        padded_out = kparams["wh"].shape[1]
    else:
        args = (x, kparams["w1"], kparams["b1"], kparams["wq"], kparams["bq"])
        kernel = _q_kernel
        padded_out = kparams["wq"].shape[1]

    n_hidden = kparams["w1"].shape[1]
    flops = 2 * B * x.shape[1] * n_hidden + 2 * B * n_hidden * padded_out
    bytes_accessed = sum(int(a.size) * 4 for a in args) + B * padded_out * 4

    out = pl.pallas_call(
        kernel,
        out_shape=jax.ShapeDtypeStruct((B, padded_out), jnp.float32),
        in_specs=[_vmem_spec() for _ in args],
        out_specs=_vmem_spec(),
        cost_estimate=pl.CostEstimate(
            flops=flops, transcendentals=0, bytes_accessed=bytes_accessed),
    )(*args)
    # drop lane padding (and, for dueling, the interleaved value column)
    return out[:, :n_output]


def init_params(key, n_feature, n_hidden, n_output, dueling=False):
    """Torch-nn.Linear-equivalent parameters, stored (in, out); biases (1, out)."""
    keys = jax.random.split(key, 8)

    def lin(kw, kb, fan_in, fan_out):
        bound = 1.0 / jnp.sqrt(jnp.float32(fan_in))
        w = jax.random.uniform(kw, (fan_in, fan_out), jnp.float32, -bound, bound)
        b = jax.random.uniform(kb, (1, fan_out), jnp.float32, -bound, bound)
        return w, b

    w1, b1 = lin(keys[0], keys[1], n_feature, n_hidden)
    params = {"w1": w1, "b1": b1}
    if dueling:
        wv, bv = lin(keys[2], keys[3], n_hidden, 1)
        wa, ba = lin(keys[4], keys[5], n_hidden, n_output)
        params.update({"wv": wv, "bv": bv, "wa": wa, "ba": ba})
    else:
        wq, bq = lin(keys[6], keys[7], n_hidden, n_output)
        params.update({"wq": wq, "bq": bq})
    return params


def prepare_kernel_params(params, n_output, dueling=False):
    """One-time fusion + lane-dense zero-padding of the head weights (init time,
    not per forward call)."""
    kp = {"w1": params["w1"], "b1": params["b1"], "n_output": n_output}
    if dueling:
        width = _round_up(n_output + 1, _LANE)
        wh = jnp.concatenate([params["wa"], params["wv"]], axis=1)   # (H, A+1)
        bh = jnp.concatenate([params["ba"], params["bv"]], axis=1)   # (1, A+1)
        kp["wh"] = jnp.pad(wh, ((0, 0), (0, width - (n_output + 1))))
        kp["bh"] = jnp.pad(bh, ((0, 0), (0, width - (n_output + 1))))
    else:
        width = _round_up(n_output, _LANE)
        kp["wq"] = jnp.pad(params["wq"], ((0, 0), (0, width - n_output)))
        kp["bq"] = jnp.pad(params["bq"], ((0, 0), (0, width - n_output)))
    return kp


def net_forward_ref(x, params, dueling=False):
    """Pure-JAX reference of the PyTorch forward (unfused, unpadded params)."""
    h = jax.nn.relu(x @ params["w1"] + params["b1"])
    if dueling:
        value = h @ params["wv"] + params["bv"]
        adv = h @ params["wa"] + params["ba"]
        return value + (adv - jnp.mean(adv, axis=1, keepdims=True))
    return h @ params["wq"] + params["bq"]


# ------------------------------- main ---------------------------------------

if __name__ == "__main__":
    key = jax.random.PRNGKey(0)
    k_x, k_p1, k_p2 = jax.random.split(key, 3)

    batch, n_feature, n_hidden, n_output = 8, 16, 32, 4
    x = jax.random.normal(k_x, (batch, n_feature), jnp.float32)

    # dueling = True path
    params_d = init_params(k_p1, n_feature, n_hidden, n_output, dueling=True)
    kparams_d = prepare_kernel_params(params_d, n_output, dueling=True)
    out_d = jax.block_until_ready(net_forward(x, kparams_d, dueling=True))
    ref_d = net_forward_ref(x, params_d, dueling=True)
    assert out_d.shape == (batch, n_output)
    assert jnp.allclose(out_d, ref_d, atol=1e-5, rtol=1e-5)

    # dueling = False path
    params_q = init_params(k_p2, n_feature, n_hidden, n_output, dueling=False)
    kparams_q = prepare_kernel_params(params_q, n_output, dueling=False)
    out_q = jax.block_until_ready(net_forward(x, kparams_q, dueling=False))
    ref_q = net_forward_ref(x, params_q, dueling=False)
    assert out_q.shape == (batch, n_output)
    assert jnp.allclose(out_q, ref_q, atol=1e-5, rtol=1e-5)

    print("KERNEL_OK")
</pallas_src>

<mosaic_0001>
module attributes {stable_mosaic.version = 11 : i64} {
  func.func @_dueling_kernel(%arg0: memref<8x16xf32, #tpu.memory_space<vmem>>, %arg1: memref<16x32xf32, #tpu.memory_space<vmem>>, %arg2: memref<1x32xf32, #tpu.memory_space<vmem>>, %arg3: memref<32x128xf32, #tpu.memory_space<vmem>>, %arg4: memref<1x128xf32, #tpu.memory_space<vmem>>, %arg5: memref<8x128xf32, #tpu.memory_space<vmem>>) attributes {dimension_semantics = [], scalar_prefetch = 0 : i64, scratch_operands = 0 : i64, tpu.core_type = #tpu.core_type<tc>} {
    %c0 = arith.constant 0 : index
    %c0_0 = arith.constant 0 : index
    %0 = vector.load %arg0[%c0, %c0_0] : memref<8x16xf32, #tpu.memory_space<vmem>>, vector<8x16xf32>
    %c0_1 = arith.constant 0 : index
    %c0_2 = arith.constant 0 : index
    %1 = vector.load %arg1[%c0_1, %c0_2] : memref<16x32xf32, #tpu.memory_space<vmem>>, vector<16x32xf32>
    %cst = arith.constant dense<0.000000e+00> : vector<8x32xf32>
    %2 = tpu.matmul %0, %1, %cst {dimension_numbers = #tpu.dot_dimension_numbers<[1], [0], [0], [1], [0, 0, 1, 1], [], []>} : vector<8x16xf32>, vector<16x32xf32>, vector<8x32xf32> -> vector<8x32xf32>
    %c0_3 = arith.constant 0 : index
    %c0_4 = arith.constant 0 : index
    %3 = vector.load %arg2[%c0_3, %c0_4] : memref<1x32xf32, #tpu.memory_space<vmem>>, vector<1x32xf32>
    %4 = vector.broadcast %3 : vector<1x32xf32> to vector<8x32xf32>
    %5 = arith.addf %2, %4 : vector<8x32xf32>
    %cst_5 = arith.constant 0.000000e+00 : f32
    %6 = vector.broadcast %cst_5 : f32 to vector<8x32xf32>
    %7 = arith.maximumf %5, %6 : vector<8x32xf32>
    %c0_6 = arith.constant 0 : index
    %c0_7 = arith.constant 0 : index
    %8 = vector.load %arg3[%c0_6, %c0_7] : memref<32x128xf32, #tpu.memory_space<vmem>>, vector<32x128xf32>
    %cst_8 = arith.constant dense<0.000000e+00> : vector<8x128xf32>
    %9 = tpu.matmul %7, %8, %cst_8 {dimension_numbers = #tpu.dot_dimension_numbers<[1], [0], [0], [1], [0, 0, 1, 1], [], []>} : vector<8x32xf32>, vector<32x128xf32>, vector<8x128xf32> -> vector<8x128xf32>
    %c0_9 = arith.constant 0 : index
    %c0_10 = arith.constant 0 : index
    %10 = vector.load %arg4[%c0_9, %c0_10] : memref<1x128xf32, #tpu.memory_space<vmem>>, vector<1x128xf32>
    %11 = vector.broadcast %10 : vector<1x128xf32> to vector<8x128xf32>
    %12 = arith.addf %9, %11 : vector<8x128xf32>
    %13 = vector.extract_strided_slice %12 {offsets = [0, 4], sizes = [8, 1], strides = [1, 1]} : vector<8x128xf32> to vector<8x1xf32>
    %cst_11 = arith.constant dense<0.000000e+00> : vector<8xf32>
    %14 = vector.multi_reduction <add>, %12, %cst_11 [1] : vector<8x128xf32> to vector<8xf32>
    %15 = vector.shape_cast %14 : vector<8xf32> to vector<8x1xf32>
    %16 = arith.subf %15, %13 : vector<8x1xf32>
    %cst_12 = arith.constant 2.500000e-01 : f32
    %17 = vector.broadcast %cst_12 : f32 to vector<8x1xf32>
    %18 = arith.mulf %16, %17 : vector<8x1xf32>
    %19 = vector.broadcast %18 : vector<8x1xf32> to vector<8x128xf32>
    %20 = arith.subf %12, %19 : vector<8x128xf32>
    %21 = vector.broadcast %13 : vector<8x1xf32> to vector<8x128xf32>
    %22 = arith.addf %21, %20 : vector<8x128xf32>
    %c0_13 = arith.constant 0 : index
    %c0_14 = arith.constant 0 : index
    %23 = vector.load %arg5[%c0_13, %c0_14] : memref<8x128xf32, #tpu.memory_space<vmem>>, vector<8x128xf32>
    tpu.vector_store %arg5[%c0_13, %c0_14], %22 {strides = array<i32>} : memref<8x128xf32, #tpu.memory_space<vmem>>, vector<8x128xf32>,
    return
  }
}

</mosaic_0001>

<llo_original>
// kernel: tpu_custom_call.1
$region0: #{tpu_custom_call.1}
  #allocation0 [shape = 'u32[]', space=smem, size = 0x4, offset = 0x4, fixed_abs, tag = 'smem constant byte address 0x4 - core index']
  #allocation1 [shape = 'u32[144,128]{1,0:T(1,128)}', space=vmem, size = 0x12000, scoped, tag = 'internal scratch']
  %s0 = inlined_call_operand.hbm [shape: f32[8,16], index: 0, kind: input, shape index: {}]
  %s1 = inlined_call_operand.hbm [shape: f32[16,32], index: 1, kind: input, shape index: {}]
  %s2 = inlined_call_operand.vmem [shape: f32[1,32], index: 2, kind: input, shape index: {}]
  %s3 = inlined_call_operand.hbm [shape: f32[32,128], index: 3, kind: input, shape index: {}]
  %s4 = inlined_call_operand.vmem [shape: f32[1,128], index: 4, kind: input, shape index: {}]
  %s5 = inlined_call_operand.hbm [shape: f32[8,128], index: 5, kind: output, shape index: {}]
  %s6 = sld [smem:[#allocation0]]
  $region42: #{tpu_custom_call.1} parent=0
    _
  %s8 = ssub.s32 1, %s6
  %s9 = scalar_select 0, %s8, %s6
  $region1: #{tpu_custom_call.1} parent=0
    #allocation2 [shape = 'u8[4096]{0}', space=vmem, size = 0x1000, scoped, tag = 'input window, operand 0, single buffered']
    #allocation3 [shape = 's32[1]{0}', space=sflag, size = 0x4, scoped, tag = 'scoped memory for tpu_custom_call.1']
    #allocation4 [shape = 's32[1]{0}', space=sflag, size = 0x4, scoped, tag = 'scoped memory for tpu_custom_call.1']
    #allocation5 [shape = 'u8[8192]{0}', space=vmem, size = 0x2000, scoped, tag = 'input window, operand 1, single buffered']
    #allocation6 [shape = 's32[1]{0}', space=sflag, size = 0x4, scoped, tag = 'scoped memory for tpu_custom_call.1']
    #allocation7 [shape = 'u8[16384]{0}', space=vmem, size = 0x4000, scoped, tag = 'input window, operand 3, single buffered']
    #allocation8 [shape = 'u8[4096]{0}', space=vmem, size = 0x1000, scoped, tag = 'output window, operand 0, single buffered']
    %10 = vsyncpa [#allocation3], 0
    %11 = vsyncpa [#allocation6], 0
    %12 = vsyncpa [#allocation4], 0
    // Predicated region
    $region2: #{tpu_custom_call.1} parent=1 // pred_check
      _
    $region3: #{tpu_custom_call.1} parent=1 // pred_check_branch
      %14 = sbr.rel (0) target = $region5
    $region4: #{tpu_custom_call.1} parent=1 // pred_region
      %s16 = ssub.s32 128, 128
      %17 = vsyncadd [#allocation3], %s16
      %s19 = sshll.u32 [#allocation2], 4
      %s20 = int_to_ptr.vmem [resolvable:$true] %s19
      %22 = dma.hbm_to_vmem [thread:$0]  %s0, 128, %s20, [#allocation3]
    $region5: #{tpu_custom_call.1} parent=1 // pred_fallthru
      _
    // Predicated region
    $region6: #{tpu_custom_call.1} parent=1 // pred_check
      _
    $region7: #{tpu_custom_call.1} parent=1 // pred_check_branch
      %24 = sbr.rel (0) target = $region9
    $region8: #{tpu_custom_call.1} parent=1 // pred_region
      %s26 = ssub.s32 256, 256
      %27 = vsyncadd [#allocation6], %s26
      %s28 = sshll.u32 [#allocation5], 4
      %s29 = int_to_ptr.vmem [resolvable:$true] %s28
      %34 = dma.hbm_to_vmem [thread:$0]  %s1, 256, %s29, [#allocation6], 128, 128, 8
    $region9: #{tpu_custom_call.1} parent=1 // pred_fallthru
      _
    // Predicated region
    $region10: #{tpu_custom_call.1} parent=1 // pred_check
      _
    $region11: #{tpu_custom_call.1} parent=1 // pred_check_branch
      %36 = sbr.rel (0) target = $region13
    $region12: #{tpu_custom_call.1} parent=1 // pred_region
      _
    $region13: #{tpu_custom_call.1} parent=1 // pred_fallthru
      _
    // Predicated region
    $region14: #{tpu_custom_call.1} parent=1 // pred_check
      _
    $region15: #{tpu_custom_call.1} parent=1 // pred_check_branch
      %38 = sbr.rel (0) target = $region17
    $region16: #{tpu_custom_call.1} parent=1 // pred_region
      %s40 = ssub.s32 512, 512
      %41 = vsyncadd [#allocation6], %s40
      %s42 = sshll.u32 [#allocation7], 4
      %s43 = int_to_ptr.vmem [resolvable:$true] %s42
      %48 = dma.hbm_to_vmem [thread:$0]  %s3, 512, %s43, [#allocation6], 128, 128, 8
    $region17: #{tpu_custom_call.1} parent=1 // pred_fallthru
      _
    // Predicated region
    $region18: #{tpu_custom_call.1} parent=1 // pred_check
      _
    $region19: #{tpu_custom_call.1} parent=1 // pred_check_branch
      %50 = sbr.rel (0) target = $region21
    $region20: #{tpu_custom_call.1} parent=1 // pred_region
      _
    $region21: #{tpu_custom_call.1} parent=1 // pred_fallthru
      _
    // Predicated region
    $region22: #{tpu_custom_call.1} parent=1 // pred_check
      _
    $region23: #{tpu_custom_call.1} parent=1 // pred_check_branch
      %52 = sbr.rel (0) target = $region25
    $region24: #{tpu_custom_call.1} parent=1 // pred_region
      %53 = dma.done [#allocation3], 128
    $region25: #{tpu_custom_call.1} parent=1 // pred_fallthru
      _
    // Predicated region
    $region26: #{tpu_custom_call.1} parent=1 // pred_check
      _
    $region27: #{tpu_custom_call.1} parent=1 // pred_check_branch
      %55 = sbr.rel (0) target = $region29
    $region28: #{tpu_custom_call.1} parent=1 // pred_region
      %56 = dma.done [#allocation6], 256
    $region29: #{tpu_custom_call.1} parent=1 // pred_fallthru
      _
    // Predicated region
    $region30: #{tpu_custom_call.1} parent=1 // pred_check
      _
    $region31: #{tpu_custom_call.1} parent=1 // pred_check_branch
      %58 = sbr.rel (0) target = $region33
    $region32: #{tpu_custom_call.1} parent=1 // pred_region
      %59 = dma.done [#allocation6], 512
    $region33: #{tpu_custom_call.1} parent=1 // pred_fallthru
      _
    %v60 = vld [vmem:[#allocation2] sm:$0xff]
    %v61 = vld [vmem:[#allocation5] sm:$0xff]
    %v62 = vld [vmem:[#allocation5 + $0x8] sm:$0xff]
    %v63 = vld [vmem:[%s2] sm:$0x1]
    %v65 = vlaneseq
    %v66 = vshrl.u32 %v65, 7
    %v67 = vsub.s32 0, %v66
    %v68 = vrot.slane %v63, %v67
    %vm70 = vcmask 130048
    %v72 = vsel %vm70, %v60, 0
    %74 = vmatprep.subr.mxu0 0.0
    %75 = vmatpush1.msra.mxu0 %v61
    %76 = vmatprep.subr.mxu0 0.0
    %77 = vmatpush1.msra.mxu0 %v62
    %78 = vmatprep.subr.mxu0 0.0
    %79 = vmatpush1.msra.mxu0 0.0
    %80 = vmatprep.subr.mxu0 0.0
    %81 = vmatpush1.msra.mxu0 0.0
    %82 = vmatprep.subr.mxu0 0.0
    %83 = vmatpush1.msra.mxu0 0.0
    %84 = vmatprep.subr.mxu0 0.0
    %85 = vmatpush1.msra.mxu0 0.0
    %86 = vmatprep.subr.mxu0 0.0
    %87 = vmatpush1.msra.mxu0 0.0
    %88 = vmatprep.subr.mxu0 0.0
    %89 = vmatpush1.msra.mxu0 0.0
    %90 = vmatprep.subr.mxu0 0.0
    %91 = vmatpush1.msra.mxu0 0.0
    %92 = vmatprep.subr.mxu0 0.0
    %93 = vmatpush1.msra.mxu0 0.0
    %94 = vmatprep.subr.mxu0 0.0
    %95 = vmatpush1.msra.mxu0 0.0
    %96 = vmatprep.subr.mxu0 0.0
    %97 = vmatpush1.msra.mxu0 0.0
    %98 = vmatprep.subr.mxu0 0.0
    %99 = vmatpush1.msra.mxu0 0.0
    %100 = vmatprep.subr.mxu0 0.0
    %101 = vmatpush1.msra.mxu0 0.0
    %102 = vmatprep.subr.mxu0 0.0
    %103 = vmatpush1.msra.mxu0 0.0
    %104 = vmatprep.subr.mxu0 0.0
    %105 = vmatpush1.msra.mxu0 0.0
    %106 = vmatprep.subr.mxu0 0.0
    %107 = vmatpush1.msra.mxu0 0.0
    %108 = vmatprep.subr.mxu0 0.0
    %109 = vmatpush1.msra.mxu0 0.0
    %110 = vmatprep.subr.mxu0 0.0
    %111 = vmatpush1.msra.mxu0 0.0
    %112 = vmatprep.subr.mxu0 0.0
    %113 = vmatpush1.msra.mxu0 0.0
    %114 = vmatprep.subr.mxu0 0.0
    %115 = vmatpush1.msra.mxu0 0.0
    %116 = vmatprep.subr.mxu0 0.0
    %117 = vmatpush1.msra.mxu0 0.0
    %118 = vmatprep.subr.mxu0 0.0
    %119 = vmatpush1.msra.mxu0 0.0
    %120 = vmatprep.subr.mxu0 0.0
    %121 = vmatpush1.msra.mxu0 0.0
    %122 = vmatprep.subr.mxu0 0.0
    %123 = vmatpush1.msra.mxu0 0.0
    %124 = vmatprep.subr.mxu0 0.0
    %125 = vmatpush1.msra.mxu0 0.0
    %126 = vmatprep.subr.mxu0 0.0
    %127 = vmatpush1.msra.mxu0 0.0
    %128 = vmatprep.subr.mxu0 0.0
    %129 = vmatpush1.msra.mxu0 0.0
    %130 = vmatprep.subr.mxu0 0.0
    %131 = vmatpush1.msra.mxu0 0.0
    %132 = vmatprep.subr.mxu0 0.0
    %133 = vmatpush1.msra.mxu0 0.0
    %134 = vmatprep.subr.mxu0 0.0
    %135 = vmatpush1.msra.mxu0 0.0
    %136 = vmatprep.subr.mxu0 0.0
    %137 = vmatpush1.msra.mxu0 0.0
    %138 = vmatprep.mubr.f32.mxu0 0.0
    %139 = vmatmul.mubr.f32.gmra.mrb[0].mxu0 %v72
    %v140 = vpop.f32.mrb[0].mxu0
    %v141 = vadd.f32 %v68, %v140
    %v142 = vpop.f32.mrb[0].mxu0
    %143 = vdwg.mxu0
    %v144 = vmax.f32 %v141, 0.0
    %v145 = vld [vmem:[#allocation7] sm:$0xff]
    %v146 = vld [vmem:[#allocation7 + $0x8] sm:$0xff]
    %v147 = vld [vmem:[#allocation7 + $0x10] sm:$0xff]
    %v148 = vld [vmem:[#allocation7 + $0x18] sm:$0xff]
    %v149 = vld [vmem:[%s4] sm:$0x1]
    %v151 = vlaneseq
    %v152 = vshrl.u32 %v151, 7
    %v153 = vsub.s32 0, %v152
    %v154 = vrot.slane %v149, %v153
    %vm156 = vcmask 261120
    %v158 = vsel %vm156, %v144, 0
    %160 = vmatprep.subr.mxu0 0.0
    %161 = vmatpush1.msra.mxu0 %v145
    %162 = vmatprep.subr.mxu0 0.0
    %163 = vmatpush1.msra.mxu0 %v146
    %164 = vmatprep.subr.mxu0 0.0
    %165 = vmatpush1.msra.mxu0 %v147
    %166 = vmatprep.subr.mxu0 0.0
    %167 = vmatpush1.msra.mxu0 %v148
    %168 = vmatprep.subr.mxu0 0.0
    %169 = vmatpush1.msra.mxu0 0.0
    %170 = vmatprep.subr.mxu0 0.0
    %171 = vmatpush1.msra.mxu0 0.0
    %172 = vmatprep.subr.mxu0 0.0
    %173 = vmatpush1.msra.mxu0 0.0
    %174 = vmatprep.subr.mxu0 0.0
    %175 = vmatpush1.msra.mxu0 0.0
    %176 = vmatprep.subr.mxu0 0.0
    %177 = vmatpush1.msra.mxu0 0.0
    %178 = vmatprep.subr.mxu0 0.0
    %179 = vmatpush1.msra.mxu0 0.0
    %180 = vmatprep.subr.mxu0 0.0
    %181 = vmatpush1.msra.mxu0 0.0
    %182 = vmatprep.subr.mxu0 0.0
    %183 = vmatpush1.msra.mxu0 0.0
    %184 = vmatprep.subr.mxu0 0.0
    %185 = vmatpush1.msra.mxu0 0.0
    %186 = vmatprep.subr.mxu0 0.0
    %187 = vmatpush1.msra.mxu0 0.0
    %188 = vmatprep.subr.mxu0 0.0
    %189 = vmatpush1.msra.mxu0 0.0
    %190 = vmatprep.subr.mxu0 0.0
    %191 = vmatpush1.msra.mxu0 0.0
    %192 = vmatprep.subr.mxu0 0.0
    %193 = vmatpush1.msra.mxu0 0.0
    %194 = vmatprep.subr.mxu0 0.0
    %195 = vmatpush1.msra.mxu0 0.0
    %196 = vmatprep.subr.mxu0 0.0
    %197 = vmatpush1.msra.mxu0 0.0
    %198 = vmatprep.subr.mxu0 0.0
    %199 = vmatpush1.msra.mxu0 0.0
    %200 = vmatprep.subr.mxu0 0.0
    %201 = vmatpush1.msra.mxu0 0.0
    %202 = vmatprep.subr.mxu0 0.0
    %203 = vmatpush1.msra.mxu0 0.0
    %204 = vmatprep.subr.mxu0 0.0
    %205 = vmatpush1.msra.mxu0 0.0
    %206 = vmatprep.subr.mxu0 0.0
    %207 = vmatpush1.msra.mxu0 0.0
    %208 = vmatprep.subr.mxu0 0.0
    %209 = vmatpush1.msra.mxu0 0.0
    %210 = vmatprep.subr.mxu0 0.0
    %211 = vmatpush1.msra.mxu0 0.0
    %212 = vmatprep.subr.mxu0 0.0
    %213 = vmatpush1.msra.mxu0 0.0
    %214 = vmatprep.subr.mxu0 0.0
    %215 = vmatpush1.msra.mxu0 0.0
    %216 = vmatprep.subr.mxu0 0.0
    %217 = vmatpush1.msra.mxu0 0.0
    %218 = vmatprep.subr.mxu0 0.0
    %219 = vmatpush1.msra.mxu0 0.0
    %220 = vmatprep.subr.mxu0 0.0
    %221 = vmatpush1.msra.mxu0 0.0
    %222 = vmatprep.subr.mxu0 0.0
    %223 = vmatpush1.msra.mxu0 0.0
    %224 = vmatprep.mubr.f32.mxu0 0.0
    %225 = vmatmul.mubr.f32.gmra.mrb[0].mxu0 %v158
    %v226 = vpop.f32.mrb[0].mxu0
    %v227 = vadd.f32 %v154, %v226
    %v228 = vpop.f32.mrb[0].mxu0
    %229 = vdwg.mxu0
    %230 = vadd.xlane.f32.xlu0 %v227
    %v231 = vpop.xlane.xlu0 %230
    %v232 = vsub.f32 %v231, %v227
    %v233 = vmul.f32 %v232, 0.25
    %235 = vset.pattern.permute.xlu0 4
    %236 = vperm.xlu0 %235, %v233
    %v237 = vpop.permute.xlu0 %236
    %v239 = vsub.f32 %v227, %v237
    %241 = vset.pattern.permute.xlu0 4
    %242 = vperm.xlu0 %241, %v227
    %v243 = vpop.permute.xlu0 %242
    %v245 = vadd.f32 %v243, %v239
    %246 = vst [vmem:[#allocation8] sm:$0xff] %v245
    // Predicated region
    $region34: #{tpu_custom_call.1} parent=1 // pred_check
      _
    $region35: #{tpu_custom_call.1} parent=1 // pred_check_branch
      %248 = sbr.rel (0) target = $region37
    $region36: #{tpu_custom_call.1} parent=1 // pred_region
      %s250 = ssub.s32 128, 128
      %251 = vsyncadd [#allocation4], %s250
      %s253 = sshll.u32 [#allocation8], 4
      %s254 = int_to_ptr.vmem [resolvable:$true] %s253
      %256 = dma.vmem_to_hbm [thread:$0]  %s254, 128, %s5, [#allocation4]
    $region37: #{tpu_custom_call.1} parent=1 // pred_fallthru
      _
    // Predicated region
    $region38: #{tpu_custom_call.1} parent=1 // pred_check
      _
    $region39: #{tpu_custom_call.1} parent=1 // pred_check_branch
      %258 = sbr.rel (0) target = $region41
    $region40: #{tpu_custom_call.1} parent=1 // pred_region
      %259 = dma.done [#allocation4], 128
    $region41: #{tpu_custom_call.1} parent=1 // pred_fallthru
      _
    %260 = vsyncpa [#allocation3], 1
    %261 = vsyncpa [#allocation6], 1
    %262 = vsyncpa [#allocation4], 1

</llo_original>
